<compile_context>
chip_gen: v6e
topology: v6e:2x2x1
jax: 0.10.0
libtpu: 0.0.40
codegen_flags: <defaults>
</compile_context>

<pallas_src>
import jax
import jax.numpy as jnp
from jax import lax
from jax.experimental import pallas as pl
from jax.experimental.pallas import tpu as pltpu


HEAD_COLS = 8   # 3 (actor_x) + 3 (actor_y) + 1 (critic) + 1 lane pad
PACK = 16       # bf16 sublane packing; [W; b] buffers pad W rows / bias block to this


def _round_up(n, m):
    return ((n + m - 1) // m) * m


def actor_critic_kernel(x_ref, wb1_ref, wb2_ref, wbh_ref, out_ref):
    # Packed buffers: rows [0:K] = W (zero-padded to K = multiple of PACK),
    # row K = bias, remaining rows zero.  K = shape[0] - PACK.
    x = x_ref[...]
    k1 = wb1_ref.shape[0] - PACK
    if x.shape[-1] < k1:  # static; no-op for input_dim % PACK == 0
        x = jnp.pad(x, ((0, 0), (0, k1 - x.shape[-1])))

    # shared trunk: Linear -> ReLU -> Linear -> ReLU
    # bf16 MXU operands, f32 accumulation; bias add / ReLU in f32.
    h = jnp.dot(x.astype(jnp.bfloat16), wb1_ref[:k1, :],
                preferred_element_type=jnp.float32)
    h = jnp.maximum(h + wb1_ref[k1:k1 + 1, :].astype(jnp.float32), 0.0)

    k2 = wb2_ref.shape[0] - PACK
    h = jnp.dot(h.astype(jnp.bfloat16), wb2_ref[:k2, :],
                preferred_element_type=jnp.float32)
    h = jnp.maximum(h + wb2_ref[k2:k2 + 1, :].astype(jnp.float32), 0.0)

    # fused heads: one (hidden, 8) matmul for actor_x | actor_y | critic | pad
    kh = wbh_ref.shape[0] - PACK
    heads = jnp.dot(h.astype(jnp.bfloat16), wbh_ref[:kh, :],
                    preferred_element_type=jnp.float32)
    heads = heads + wbh_ref[kh:kh + 1, :].astype(jnp.float32)

    # grouped softmax over lane groups [0:3] and [3:6]; col 6 passes through,
    # col 7 (pad) is forced to zero.  All ops are full-width on the (tb, 8)
    # slab -> no lane-offset slices / concatenations in the kernel.
    cols = lax.broadcasted_iota(jnp.int32, heads.shape, 1)
    neg_inf = jnp.float32(-jnp.inf)

    def group_softmax(mask):
        lg = jnp.where(mask, heads, neg_inf)
        m = jnp.max(lg, axis=-1, keepdims=True)
        e = jnp.exp(lg - m)                # masked cols -> exp(-inf) = 0
        s = jnp.sum(e, axis=-1, keepdims=True)
        return e / s                       # exact divide: rows sum to 1

    px = group_softmax(cols < 3)
    py = group_softmax((cols >= 3) & (cols < 6))
    val = jnp.where(cols == 6, heads, 0.0)

    out_ref[...] = px + py + val


def init_params(key, input_dim=16, hidden_dim=128):
    """Deterministic init mimicking torch.nn.Linear defaults
    (U[-1/sqrt(fan_in), 1/sqrt(fan_in)]).  Returns bf16 packed buffers:
      wb1: (pad(input_dim)+PACK, hidden)  rows [0:in]=W1, row [pad(in)]=b1
      wb2: (pad(hidden)+PACK,    hidden)  rows [0:h] =W2, row [pad(h)] =b2
      wbh: (pad(hidden)+PACK,    8)       cols [0:3]=actor_x, [3:6]=actor_y,
                                          [6]=critic, [7]=zero pad
    where pad(n) = round_up(n, PACK) (tile-aligned slices for any fan_in).
    """
    def linear(k, fan_in, fan_out):
        kw, kb = jax.random.split(k)
        bound = 1.0 / jnp.sqrt(jnp.float32(fan_in))
        w = jax.random.uniform(kw, (fan_in, fan_out), jnp.float32, -bound, bound)
        b = jax.random.uniform(kb, (fan_out,), jnp.float32, -bound, bound)
        return w, b

    def pack(w, b):
        fan_in, fan_out = w.shape
        kp = _round_up(fan_in, PACK)
        buf = jnp.zeros((kp + PACK, fan_out), jnp.float32)
        buf = buf.at[:fan_in].set(w)
        buf = buf.at[kp].set(b)
        return buf.astype(jnp.bfloat16)

    k1, k2, k3, k4, k5 = jax.random.split(key, 5)
    w1, b1 = linear(k1, input_dim, hidden_dim)
    w2, b2 = linear(k2, hidden_dim, hidden_dim)
    wx, bx = linear(k3, hidden_dim, 3)
    wy, by = linear(k4, hidden_dim, 3)
    wc, bc = linear(k5, hidden_dim, 1)

    wh = jnp.concatenate(
        [wx, wy, wc, jnp.zeros((hidden_dim, 1), jnp.float32)], axis=1)
    bh = jnp.concatenate([bx, by, bc, jnp.zeros((1,), jnp.float32)], axis=0)
    return (pack(w1, b1), pack(w2, b2), pack(wh, bh))


def actor_critic_forward(x, params, *, batch_tile=1024):
    wb1, wb2, wbh = params
    B, d_in = x.shape

    # Batch tiling: no wrapper-side padding.  For B <= 8 use a full-batch
    # block (always layout-legal); otherwise a multiple-of-8 tile capped so
    # the grid has >= 2 steps (v7x: two TensorCores share the batch axis).
    # The trailing partial block, if any, is masked by Pallas.
    if B <= 8:
        tb = B
    else:
        tb = min(batch_tile, max(8, _round_up(pl.cdiv(B, 2), 8)))
    grid = (pl.cdiv(B, tb),)

    def resident_spec(a):
        # Grid-invariant weight buffers: stay resident in VMEM across steps.
        return pl.BlockSpec(a.shape, lambda i: (0, 0))

    out = pl.pallas_call(
        actor_critic_kernel,
        out_shape=jax.ShapeDtypeStruct((B, HEAD_COLS), jnp.float32),
        grid_spec=pltpu.PrefetchScalarGridSpec(
            num_scalar_prefetch=0,
            grid=grid,
            in_specs=[
                pl.BlockSpec((tb, d_in), lambda i: (i, 0)),
                resident_spec(wb1),
                resident_spec(wb2),
                resident_spec(wbh),
            ],
            out_specs=pl.BlockSpec((tb, HEAD_COLS), lambda i: (i, 0)),
        ),
        compiler_params=pltpu.CompilerParams(
            dimension_semantics=("parallel",)),
    )(x, wb1, wb2, wbh)

    prob_x = out[:, 0:3]
    prob_y = out[:, 3:6]
    value = out[:, 6:7]
    return prob_x, prob_y, value


def actor_critic_ref(x, params):
    """Pure-JAX reference with PyTorch forward semantics (weights are the
    bf16-packed buffers cast back to f32; activations kept in f32)."""
    wb1, wb2, wbh = params

    def unpack(wb, fan_in):
        kp = wb.shape[0] - PACK
        return wb[:fan_in].astype(jnp.float32), wb[kp].astype(jnp.float32)

    w1, b1 = unpack(wb1, x.shape[-1])
    h = jnp.maximum(x @ w1 + b1, 0.0)
    w2, b2 = unpack(wb2, h.shape[-1])
    h = jnp.maximum(h @ w2 + b2, 0.0)
    wh, bh = unpack(wbh, h.shape[-1])
    heads = h @ wh + bh
    px = jax.nn.softmax(heads[:, 0:3], axis=-1)
    py = jax.nn.softmax(heads[:, 3:6], axis=-1)
    v = heads[:, 6:7]
    return px, py, v


if __name__ == "__main__":
    INPUT_DIM = 16
    HIDDEN_DIM = 128
    BATCH = 12  # not a multiple of the tile -> exercises the masked tail block

    key = jax.random.PRNGKey(0)
    k_x, k_p = jax.random.split(key)
    x = jax.random.normal(k_x, (BATCH, INPUT_DIM), jnp.float32)
    params = init_params(k_p, INPUT_DIM, HIDDEN_DIM)

    prob_x, prob_y, value = actor_critic_forward(x, params)
    jax.block_until_ready((prob_x, prob_y, value))

    # sanity checks against a pure-JAX reference
    rx, ry, rv = actor_critic_ref(x, params)
    assert prob_x.shape == (BATCH, 3)
    assert prob_y.shape == (BATCH, 3)
    assert value.shape == (BATCH, 1)
    # bf16 matmul operands (f32 accumulation) -> small numeric differences
    assert jnp.allclose(prob_x, rx, atol=2e-2)
    assert jnp.allclose(prob_y, ry, atol=2e-2)
    assert jnp.allclose(value, rv, atol=2e-2)
    # exact softmax normalization: rows sum to 1 to f32 rounding
    assert jnp.allclose(jnp.sum(prob_x, axis=-1), 1.0, atol=1e-5)
    assert jnp.allclose(jnp.sum(prob_y, axis=-1), 1.0, atol=1e-5)

    print("KERNEL_OK")
</pallas_src>

<mosaic_0001>
module attributes {stable_mosaic.version = 11 : i64} {
  func.func @actor_critic_kernel(%arg0: i32, %arg1: memref<8x16xf32, #tpu.memory_space<vmem>>, %arg2: memref<32x128xbf16, #tpu.memory_space<vmem>>, %arg3: memref<144x128xbf16, #tpu.memory_space<vmem>>, %arg4: memref<144x8xbf16, #tpu.memory_space<vmem>>, %arg5: memref<8x8xf32, #tpu.memory_space<vmem>>) attributes {dimension_semantics = [#tpu.dimension_semantics<parallel>], iteration_bounds = array<i64: 2>, scalar_prefetch = 0 : i64, scratch_operands = 0 : i64, tpu.core_type = #tpu.core_type<tc>, window_params = [{transform_indices = @transform_0, window_bounds = array<i64: 8, 16>}, {pipeline_mode = #tpu.pipeline_mode<synchronous>, transform_indices = @transform_1, window_bounds = array<i64: 32, 128>}, {pipeline_mode = #tpu.pipeline_mode<synchronous>, transform_indices = @transform_2, window_bounds = array<i64: 144, 128>}, {pipeline_mode = #tpu.pipeline_mode<synchronous>, transform_indices = @transform_3, window_bounds = array<i64: 144, 8>}, {transform_indices = @transform_4, window_bounds = array<i64: 8, 8>}]} {
    %c0 = arith.constant 0 : index
    %c0_0 = arith.constant 0 : index
    %0 = vector.load %arg1[%c0, %c0_0] : memref<8x16xf32, #tpu.memory_space<vmem>>, vector<8x16xf32>
    %1 = arith.truncf %0 : vector<8x16xf32> to vector<8x16xbf16>
    %c0_1 = arith.constant 0 : index
    %c0_2 = arith.constant 0 : index
    %2 = vector.load %arg2[%c0_1, %c0_2] : memref<32x128xbf16, #tpu.memory_space<vmem>>, vector<16x128xbf16>
    %cst = arith.constant dense<0.000000e+00> : vector<8x128xf32>
    %3 = tpu.matmul %1, %2, %cst {dimension_numbers = #tpu.dot_dimension_numbers<[1], [0], [0], [1], [0, 0, 1, 1], [], []>} : vector<8x16xbf16>, vector<16x128xbf16>, vector<8x128xf32> -> vector<8x128xf32>
    %c16 = arith.constant 16 : index
    %c0_3 = arith.constant 0 : index
    %4 = vector.load %arg2[%c16, %c0_3] : memref<32x128xbf16, #tpu.memory_space<vmem>>, vector<1x128xbf16>
    %5 = arith.extf %4 : vector<1x128xbf16> to vector<1x128xf32>
    %6 = vector.broadcast %5 : vector<1x128xf32> to vector<8x128xf32>
    %7 = arith.addf %3, %6 : vector<8x128xf32>
    %cst_4 = arith.constant 0.000000e+00 : f32
    %8 = vector.broadcast %cst_4 : f32 to vector<8x128xf32>
    %9 = arith.maximumf %7, %8 : vector<8x128xf32>
    %10 = arith.truncf %9 : vector<8x128xf32> to vector<8x128xbf16>
    %c0_5 = arith.constant 0 : index
    %c0_6 = arith.constant 0 : index
    %11 = vector.load %arg3[%c0_5, %c0_6] : memref<144x128xbf16, #tpu.memory_space<vmem>>, vector<128x128xbf16>
    %cst_7 = arith.constant dense<0.000000e+00> : vector<8x128xf32>
    %12 = tpu.matmul %10, %11, %cst_7 {dimension_numbers = #tpu.dot_dimension_numbers<[1], [0], [0], [1], [0, 0, 1, 1], [], []>} : vector<8x128xbf16>, vector<128x128xbf16>, vector<8x128xf32> -> vector<8x128xf32>
    %c128 = arith.constant 128 : index
    %c0_8 = arith.constant 0 : index
    %13 = vector.load %arg3[%c128, %c0_8] : memref<144x128xbf16, #tpu.memory_space<vmem>>, vector<1x128xbf16>
    %14 = arith.extf %13 : vector<1x128xbf16> to vector<1x128xf32>
    %15 = vector.broadcast %14 : vector<1x128xf32> to vector<8x128xf32>
    %16 = arith.addf %12, %15 : vector<8x128xf32>
    %cst_9 = arith.constant 0.000000e+00 : f32
    %17 = vector.broadcast %cst_9 : f32 to vector<8x128xf32>
    %18 = arith.maximumf %16, %17 : vector<8x128xf32>
    %19 = arith.truncf %18 : vector<8x128xf32> to vector<8x128xbf16>
    %c0_10 = arith.constant 0 : index
    %c0_11 = arith.constant 0 : index
    %20 = vector.load %arg4[%c0_10, %c0_11] : memref<144x8xbf16, #tpu.memory_space<vmem>>, vector<128x8xbf16>
    %cst_12 = arith.constant dense<0.000000e+00> : vector<8x8xf32>
    %21 = tpu.matmul %19, %20, %cst_12 {dimension_numbers = #tpu.dot_dimension_numbers<[1], [0], [0], [1], [0, 0, 1, 1], [], []>} : vector<8x128xbf16>, vector<128x8xbf16>, vector<8x8xf32> -> vector<8x8xf32>
    %c128_13 = arith.constant 128 : index
    %c0_14 = arith.constant 0 : index
    %22 = vector.load %arg4[%c128_13, %c0_14] : memref<144x8xbf16, #tpu.memory_space<vmem>>, vector<1x8xbf16>
    %23 = arith.extf %22 : vector<1x8xbf16> to vector<1x8xf32>
    %24 = vector.broadcast %23 : vector<1x8xf32> to vector<8x8xf32>
    %25 = arith.addf %21, %24 : vector<8x8xf32>
    %26 = tpu.iota {dimensions = array<i32: 1>} : vector<8x8xi32>
    %c3_i32 = arith.constant 3 : i32
    %27 = vector.broadcast %c3_i32 : i32 to vector<8x8xi32>
    %28 = arith.cmpi slt, %26, %27 : vector<8x8xi32>
    %cst_15 = arith.constant 0xFF800000 : f32
    %29 = vector.broadcast %cst_15 : f32 to vector<8x8xf32>
    %30 = arith.select %28, %25, %29 : vector<8x8xi1>, vector<8x8xf32>
    %cst_16 = arith.constant dense<0xFF800000> : vector<8xf32>
    %31 = vector.multi_reduction <maximumf>, %30, %cst_16 [1] : vector<8x8xf32> to vector<8xf32>
    %32 = vector.shape_cast %31 : vector<8xf32> to vector<8x1xf32>
    %33 = vector.broadcast %32 : vector<8x1xf32> to vector<8x8xf32>
    %34 = arith.subf %30, %33 : vector<8x8xf32>
    %35 = math.exp %34 : vector<8x8xf32>
    %cst_17 = arith.constant dense<0.000000e+00> : vector<8xf32>
    %36 = vector.multi_reduction <add>, %35, %cst_17 [1] : vector<8x8xf32> to vector<8xf32>
    %37 = vector.shape_cast %36 : vector<8xf32> to vector<8x1xf32>
    %38 = vector.broadcast %37 : vector<8x1xf32> to vector<8x8xf32>
    %39 = arith.divf %35, %38 : vector<8x8xf32>
    %c3_i32_18 = arith.constant 3 : i32
    %40 = vector.broadcast %c3_i32_18 : i32 to vector<8x8xi32>
    %41 = arith.cmpi sge, %26, %40 : vector<8x8xi32>
    %c6_i32 = arith.constant 6 : i32
    %42 = vector.broadcast %c6_i32 : i32 to vector<8x8xi32>
    %43 = arith.cmpi slt, %26, %42 : vector<8x8xi32>
    %44 = arith.andi %41, %43 : vector<8x8xi1>
    %cst_19 = arith.constant 0xFF800000 : f32
    %45 = vector.broadcast %cst_19 : f32 to vector<8x8xf32>
    %46 = arith.select %44, %25, %45 : vector<8x8xi1>, vector<8x8xf32>
    %cst_20 = arith.constant dense<0xFF800000> : vector<8xf32>
    %47 = vector.multi_reduction <maximumf>, %46, %cst_20 [1] : vector<8x8xf32> to vector<8xf32>
    %48 = vector.shape_cast %47 : vector<8xf32> to vector<8x1xf32>
    %49 = vector.broadcast %48 : vector<8x1xf32> to vector<8x8xf32>
    %50 = arith.subf %46, %49 : vector<8x8xf32>
    %51 = math.exp %50 : vector<8x8xf32>
    %cst_21 = arith.constant dense<0.000000e+00> : vector<8xf32>
    %52 = vector.multi_reduction <add>, %51, %cst_21 [1] : vector<8x8xf32> to vector<8xf32>
    %53 = vector.shape_cast %52 : vector<8xf32> to vector<8x1xf32>
    %54 = vector.broadcast %53 : vector<8x1xf32> to vector<8x8xf32>
    %55 = arith.divf %51, %54 : vector<8x8xf32>
    %c6_i32_22 = arith.constant 6 : i32
    %56 = vector.broadcast %c6_i32_22 : i32 to vector<8x8xi32>
    %57 = arith.cmpi eq, %26, %56 : vector<8x8xi32>
    %cst_23 = arith.constant 0.000000e+00 : f32
    %58 = vector.broadcast %cst_23 : f32 to vector<8x8xf32>
    %59 = arith.select %57, %25, %58 : vector<8x8xi1>, vector<8x8xf32>
    %60 = arith.addf %39, %55 : vector<8x8xf32>
    %61 = arith.addf %60, %59 : vector<8x8xf32>
    %c0_24 = arith.constant 0 : index
    %c0_25 = arith.constant 0 : index
    %62 = vector.load %arg5[%c0_24, %c0_25] : memref<8x8xf32, #tpu.memory_space<vmem>>, vector<8x8xf32>
    tpu.vector_store %arg5[%c0_24, %c0_25], %61 {strides = array<i32>} : memref<8x8xf32, #tpu.memory_space<vmem>>, vector<8x8xf32>,
    return
  }
  func.func @transform_0(%arg0: i32) -> (i32, i32) {
    %c0_i32 = arith.constant 0 : i32
    %c0_i32_0 = arith.constant 0 : i32
    return %arg0, %c0_i32 : i32, i32
  }
  func.func @transform_1(%arg0: i32) -> (i32, i32) {
    %c0_i32 = arith.constant 0 : i32
    %c0_i32_0 = arith.constant 0 : i32
    %c0_i32_1 = arith.constant 0 : i32
    return %c0_i32, %c0_i32_0 : i32, i32
  }
  func.func @transform_2(%arg0: i32) -> (i32, i32) {
    %c0_i32 = arith.constant 0 : i32
    %c0_i32_0 = arith.constant 0 : i32
    %c0_i32_1 = arith.constant 0 : i32
    return %c0_i32, %c0_i32_0 : i32, i32
  }
  func.func @transform_3(%arg0: i32) -> (i32, i32) {
    %c0_i32 = arith.constant 0 : i32
    %c0_i32_0 = arith.constant 0 : i32
    %c0_i32_1 = arith.constant 0 : i32
    return %c0_i32, %c0_i32_0 : i32, i32
  }
  func.func @transform_4(%arg0: i32) -> (i32, i32) {
    %c0_i32 = arith.constant 0 : i32
    %c0_i32_0 = arith.constant 0 : i32
    return %arg0, %c0_i32 : i32, i32
  }
}

</mosaic_0001>

<llo_original>
// kernel: tpu_custom_call.1
$region0: #{tpu_custom_call.1}
  #allocation0 [shape = 'u32[]', space=smem, size = 0x4, offset = 0x4, fixed_abs, tag = 'smem constant byte address 0x4 - core index']
  #allocation1 [shape = 'u32[144,128]{1,0:T(1,128)}', space=vmem, size = 0x12000, scoped, tag = 'internal scratch']
  %s0 = inlined_call_operand.hbm [shape: f32[12,16], index: 0, kind: input, shape index: {}]
  %s1 = inlined_call_operand.hbm [shape: bf16[32,128], index: 1, kind: input, shape index: {}]
  %s2 = inlined_call_operand.vmem [shape: bf16[144,128], index: 2, kind: input, shape index: {}]
  %s3 = inlined_call_operand.vmem [shape: bf16[144,8], index: 3, kind: input, shape index: {}]
  %s4 = inlined_call_operand.vmem [shape: f32[12,8], index: 4, kind: output, shape index: {}]
  %s5 = sld [smem:[#allocation0]]
  $region57: #{tpu_custom_call.1} parent=0
    _
  %s7 = ssub.s32 1, %s5
  %s8 = scalar_select 0, %s7, %s5
  $region1: #{tpu_custom_call.1} parent=0
    #allocation2 [shape = 'u8[8192]{0}', space=vmem, size = 0x2000, scoped, tag = 'input window, operand 0']
    #allocation3 [shape = 's32[2]{0}', space=sflag, size = 0x8, scoped, tag = 'scoped memory for tpu_custom_call.1']
    #allocation4 [shape = 'u8[8192]{0}', space=vmem, size = 0x2000, scoped, tag = 'input window, operand 1, single buffered']
    #allocation5 [shape = 's32[1]{0}', space=sflag, size = 0x4, scoped, tag = 'scoped memory for tpu_custom_call.1']
    %9 = vsyncpa [#allocation3], 0
    %s10 = scalar_lea.sflag [#allocation3], 1
    %11 = vsyncpa %s10, 0
    %12 = vsyncpa [#allocation5], 0
    loop: start=0, step=1, limit=4
    $region2: #{tpu_custom_call.1} parent=1 // loop_pre_header
      _
    $region3: #{tpu_custom_call.1} parent=1 // loop_header
      %s14 = sphi 0, %s18
      %p15 = scmp.ge.s32.totalorder %s14, 4
      %s24 = sphi 0, %s26
      %s27 = sphi 0, %s24
      %s28 = sphi 0, %s27
      %s44 = sphi 0, %s28
      %s48 = sphi 0, %s48
      %s50 = sphi 0, %s48
      %s51 = sphi 0, %s50
      %s65 = sphi 0, %s51
      %s69 = sphi 0, %s69
      %s71 = sphi 0, %s69
      %s72 = sphi 0, %s71
      %s86 = sphi 0, %s72
      %s90 = sphi 0, %s90
      %s92 = sphi 0, %s90
      %s93 = sphi 0, %s92
      %s107 = sphi 0, %s93
      %s113 = sphi 0, %s115
      %s116 = sphi 0, %s113
      %s117 = sphi 0, %s116
      %s133 = sphi 0, %s117
    $region4: #{tpu_custom_call.1} parent=1 // loop_header_branch
      %17 = sbr.rel (%p15) target = $region8
    $region5: #{tpu_custom_call.1} parent=1 // loop_body
      %s19 = ssub.s32 %s14, 1
      %s20 = ssub.s32 %s14, 2
      %s21 = sadd.s32 %s14, 1
      %s22 = ssub.s32 %s14, %s21
      %p23 = scmp.eq.s32.totalorder %s22, 0
      %s25 = sadd.s32 %s24, 1
      %s26 = scalar_select %p23, %s24, %s25
      %p29 = pneg %p23
      %p30 = scmp.eq.s32.totalorder %s14, 1
      %p31 = por %p29, %p30
      %p32 = scmp.ne.s32.totalorder %s24, %s27
      %p33 = scmp.eq.s32.totalorder %s14, 0
      %p34 = por %p32, %p33
      %p35 = scmp.ne.s32.totalorder %s24, %s27
      %p36 = scmp.eq.s32.totalorder %s19, 1
      %p37 = por %p35, %p36
      %p38 = scmp.ne.s32.totalorder %s27, %s28
      %p39 = scmp.eq.s32.totalorder %s19, 0
      %p40 = por %p38, %p39
      %p41 = scmp.ne.s32.totalorder %s27, %s28
      %p42 = scmp.eq.s32.totalorder %s20, 1
      %p43 = por %p41, %p42
      %p45 = scmp.ne.s32.totalorder %s28, %s44
      %p46 = scmp.eq.s32.totalorder %s20, 0
      %p47 = por %p45, %p46
      %s49 = sadd.s32 %s48, 1
      %p52 = scmp.eq.s32.totalorder %s14, 1
      %p53 = scmp.ne.s32.totalorder %s48, %s50
      %p54 = scmp.eq.s32.totalorder %s14, 0
      %p55 = por %p53, %p54
      %p56 = scmp.ne.s32.totalorder %s48, %s50
      %p57 = scmp.eq.s32.totalorder %s19, 1
      %p58 = por %p56, %p57
      %p59 = scmp.ne.s32.totalorder %s50, %s51
      %p60 = scmp.eq.s32.totalorder %s19, 0
      %p61 = por %p59, %p60
      %p62 = scmp.ne.s32.totalorder %s50, %s51
      %p63 = scmp.eq.s32.totalorder %s20, 1
      %p64 = por %p62, %p63
      %p66 = scmp.ne.s32.totalorder %s51, %s65
      %p67 = scmp.eq.s32.totalorder %s20, 0
      %p68 = por %p66, %p67
      %s70 = sadd.s32 %s69, 1
      %p73 = scmp.eq.s32.totalorder %s14, 1
      %p74 = scmp.ne.s32.totalorder %s69, %s71
      %p75 = scmp.eq.s32.totalorder %s14, 0
      %p76 = por %p74, %p75
      %p77 = scmp.ne.s32.totalorder %s69, %s71
      %p78 = scmp.eq.s32.totalorder %s19, 1
      %p79 = por %p77, %p78
      %p80 = scmp.ne.s32.totalorder %s71, %s72
      %p81 = scmp.eq.s32.totalorder %s19, 0
      %p82 = por %p80, %p81
      %p83 = scmp.ne.s32.totalorder %s71, %s72
      %p84 = scmp.eq.s32.totalorder %s20, 1
      %p85 = por %p83, %p84
      %p87 = scmp.ne.s32.totalorder %s72, %s86
      %p88 = scmp.eq.s32.totalorder %s20, 0
      %p89 = por %p87, %p88
      %s91 = sadd.s32 %s90, 1
      %p94 = scmp.eq.s32.totalorder %s14, 1
      %p95 = scmp.ne.s32.totalorder %s90, %s92
      %p96 = scmp.eq.s32.totalorder %s14, 0
      %p97 = por %p95, %p96
      %p98 = scmp.ne.s32.totalorder %s90, %s92
      %p99 = scmp.eq.s32.totalorder %s19, 1
      %p100 = por %p98, %p99
      %p101 = scmp.ne.s32.totalorder %s92, %s93
      %p102 = scmp.eq.s32.totalorder %s19, 0
      %p103 = por %p101, %p102
      %p104 = scmp.ne.s32.totalorder %s92, %s93
      %p105 = scmp.eq.s32.totalorder %s20, 1
      %p106 = por %p104, %p105
      %p108 = scmp.ne.s32.totalorder %s93, %s107
      %p109 = scmp.eq.s32.totalorder %s20, 0
      %p110 = por %p108, %p109
      %s111 = ssub.s32 %s14, %s21
      %p112 = scmp.eq.s32.totalorder %s111, 0
      %s114 = sadd.s32 %s113, 1
      %s115 = scalar_select %p112, %s113, %s114
      %p118 = pneg %p112
      %p119 = scmp.eq.s32.totalorder %s14, 1
      %p120 = por %p118, %p119
      %p121 = scmp.ne.s32.totalorder %s113, %s116
      %p122 = scmp.eq.s32.totalorder %s14, 0
      %p123 = por %p121, %p122
      %p124 = scmp.ne.s32.totalorder %s113, %s116
      %p125 = scmp.eq.s32.totalorder %s19, 1
      %p126 = por %p124, %p125
      %p127 = scmp.ne.s32.totalorder %s116, %s117
      %p128 = scmp.eq.s32.totalorder %s19, 0
      %p129 = por %p127, %p128
      %p130 = scmp.ne.s32.totalorder %s116, %s117
      %p131 = scmp.eq.s32.totalorder %s20, 1
      %p132 = por %p130, %p131
      %p134 = scmp.ne.s32.totalorder %s117, %s133
      %p135 = scmp.eq.s32.totalorder %s20, 0
      %p136 = por %p134, %p135
      %p137 = scmp.le.s32.totalorder 1, %s14
      %p138 = scmp.lt.s32.totalorder %s14, 3
      %p139 = pnand %p137, %p138
      %p140 = pneg %p139
      // Predicated region
      $region9: #{tpu_custom_call.1} parent=5 // pred_check
        _
      $region10: #{tpu_custom_call.1} parent=5 // pred_check_branch
        %142 = sbr.rel (%p139) target = $region12
      $region11: #{tpu_custom_call.1} parent=5 // pred_region
        %s143 = ssub.s32 %s14, 1
        // Predicated region
        $region13: #{tpu_custom_call.1} parent=11 // pred_check
          %p144 = pneg %p61
        $region14: #{tpu_custom_call.1} parent=11 // pred_check_branch
          %146 = sbr.rel (%p144) target = $region16
        $region15: #{tpu_custom_call.1} parent=11 // pred_region
          %s148 = ssub.s32 256, 256
          %149 = vsyncadd [#allocation5], %s148
          %s150 = sshll.u32 [#allocation4], 4
          %s151 = int_to_ptr.vmem [resolvable:$true] %s150
          %156 = dma.hbm_to_vmem [thread:$0]  %s1, 256, %s151, [#allocation5], 64, 64, 4
        $region16: #{tpu_custom_call.1} parent=11 // pred_fallthru
          _
        // Predicated region
        $region17: #{tpu_custom_call.1} parent=11 // pred_check
          %p157 = pneg %p82
        $region18: #{tpu_custom_call.1} parent=11 // pred_check_branch
          %159 = sbr.rel (%p157) target = $region20
        $region19: #{tpu_custom_call.1} parent=11 // pred_region
          _
        $region20: #{tpu_custom_call.1} parent=11 // pred_fallthru
          _
        // Predicated region
        $region21: #{tpu_custom_call.1} parent=11 // pred_check
          %p160 = pneg %p103
        $region22: #{tpu_custom_call.1} parent=11 // pred_check_branch
          %162 = sbr.rel (%p160) target = $region24
        $region23: #{tpu_custom_call.1} parent=11 // pred_region
          _
        $region24: #{tpu_custom_call.1} parent=11 // pred_fallthru
          _
      $region12: #{tpu_custom_call.1} parent=5 // pred_fallthru
        _
      %p163 = scmp.lt.s32.totalorder %s14, 2
      // Predicated region
      $region25: #{tpu_custom_call.1} parent=5 // pred_check
        %p164 = pneg %p163
      $region26: #{tpu_custom_call.1} parent=5 // pred_check_branch
        %166 = sbr.rel (%p164) target = $region28
      $region27: #{tpu_custom_call.1} parent=5 // pred_region
        // Predicated region
        $region29: #{tpu_custom_call.1} parent=27 // pred_check
          %p167 = pneg %p34
        $region30: #{tpu_custom_call.1} parent=27 // pred_check_branch
          %169 = sbr.rel (%p167) target = $region32
        $region31: #{tpu_custom_call.1} parent=27 // pred_region
          %s170 = sand.u32 %s24, 1
          %s171 = scalar_lea.sflag [#allocation3], %s170
          %s172 = sand.u32 %s24, 1
          %s173 = smul.addr %s172, 8
          %s174 = scalar_lea.vmem [#allocation2], %s173
          %s176 = ssub.s32 128, 128
          %177 = vsyncadd %s171, %s176
          %s178 = smul.addr %s14, 128
          %s179 = scalar_lea.hbm %s0, %s178
          %s181 = sshll.u32 %s174, 4
          %s182 = int_to_ptr.vmem [resolvable:$true] %s181
          %184 = dma.hbm_to_vmem [thread:$0]  %s179, 128, %s182, %s171
        $region32: #{tpu_custom_call.1} parent=27 // pred_fallthru
          _
      $region28: #{tpu_custom_call.1} parent=5 // pred_fallthru
        _
      %p185 = scmp.le.s32.totalorder 1, %s14
      %p186 = scmp.lt.s32.totalorder %s14, 3
      %p187 = pnand %p185, %p186
      %p188 = pneg %p187
      // Predicated region
      $region33: #{tpu_custom_call.1} parent=5 // pred_check
        _
      $region34: #{tpu_custom_call.1} parent=5 // pred_check_branch
        %190 = sbr.rel (%p187) target = $region36
      $region35: #{tpu_custom_call.1} parent=5 // pred_region
        %s191 = ssub.s32 %s14, 1
        %s192 = sand.u32 %s27, 1
        %s193 = scalar_lea.sflag [#allocation3], %s192
        %s194 = sand.u32 %s27, 1
        %s195 = smul.addr %s194, 8
        %s196 = scalar_lea.vmem [#allocation2], %s195
        // Predicated region
        $region37: #{tpu_custom_call.1} parent=35 // pred_check
          %p197 = pneg %p40
        $region38: #{tpu_custom_call.1} parent=35 // pred_check_branch
          %199 = sbr.rel (%p197) target = $region40
        $region39: #{tpu_custom_call.1} parent=35 // pred_region
          %200 = dma.done %s193, 128
        $region40: #{tpu_custom_call.1} parent=35 // pred_fallthru
          _
        // Predicated region
        $region41: #{tpu_custom_call.1} parent=35 // pred_check
          %p201 = pneg %p61
        $region42: #{tpu_custom_call.1} parent=35 // pred_check_branch
          %203 = sbr.rel (%p201) target = $region44
        $region43: #{tpu_custom_call.1} parent=35 // pred_region
          %204 = dma.done [#allocation5], 256
        $region44: #{tpu_custom_call.1} parent=35 // pred_fallthru
          _
        %s205 = sand.u32 %s27, 1
        %s206 = scalar_lea.sflag [#allocation3], %s205
        %s207 = sand.u32 %s27, 1
        %s208 = smul.addr %s207, 8
        %s209 = scalar_lea.vmem [#allocation2], %s208
        %p210 = pneg %p40
        %p211 = pneg %p37
        %p212 = pneg %p61
        %p213 = pneg %p58
        %p214 = pneg %p82
        %p215 = pneg %p79
        %p216 = pneg %p103
        %p217 = pneg %p100
        %p218 = pneg %p129
        %p219 = pneg %p126
        %p220 = scmp.lt.s32.totalorder %s19, 1
        %s221 = scalar_select %p220, %s19, 1
        %s222 = smul.addr %s221, 8
        %s223 = scalar_lea.vmem %s4, %s222
        %p224 = scmp.lt.s32.totalorder %s19, 1
        %s225 = scalar_select %p224, %s19, 1
        %s226 = smul.addr %s225, 8
        %s227 = scalar_lea.vmem %s4, %s226
        %v229 = vld [vmem:[%s196] sm:$0xff]
        %v230 = vpack.c.bf16 %v229, %v229
        %v231 = vld [vmem:[#allocation4] sm:$0xf]
        %v232 = vld [vmem:[#allocation4 + $0x4] sm:$0xf]
        %v233 = vld [vmem:[#allocation4 + $0x8] sm:$0x1]
        %v234 = vunpack.c.l.bf16 %v233
        %v235 = vlaneseq
        %v236 = vshrl.u32 %v235, 7
        %v237 = vsub.s32 0, %v236
        %v238 = vrot.slane %v234, %v237
        %v241 = vunpack.c.l.b16 %v231
        %v242 = vunpack.c.l.b16 %v232
        %v243 = vpack.c.b16 %v242, %v241
        %vm245 = vcmask 130048
        %v247 = vsel %vm245, %v230, 0
        %249 = vmatprep.subr.bf16.mxu0 0
        %250 = vmatpush1.bf16.msra.mxu0 0
        %251 = vmatprep.subr.bf16.mxu0 0
        %252 = vmatpush1.bf16.msra.mxu0 0
        %253 = vmatprep.subr.bf16.mxu0 0
        %254 = vmatpush1.bf16.msra.mxu0 0
        %255 = vmatprep.subr.bf16.mxu0 0
        %256 = vmatpush1.bf16.msra.mxu0 0
        %257 = vmatprep.subr.bf16.mxu0 0
        %258 = vmatpush1.bf16.msra.mxu0 0
        %259 = vmatprep.subr.bf16.mxu0 0
        %260 = vmatpush1.bf16.msra.mxu0 0
        %261 = vmatprep.subr.bf16.mxu0 0
        %262 = vmatpush1.bf16.msra.mxu0 0
        %263 = vmatprep.subr.bf16.mxu0 0
        %264 = vmatpush1.bf16.msra.mxu0 %v243
        %265 = vmatprep.subr.bf16.mxu0 0
        %266 = vmatpush2.bf16.msra.mxu0 0
        %267 = vmatprep.subr.bf16.mxu0 0
        %268 = vmatpush2.bf16.msra.mxu0 0
        %269 = vmatprep.subr.bf16.mxu0 0
        %270 = vmatpush2.bf16.msra.mxu0 0
        %271 = vmatprep.subr.bf16.mxu0 0
        %272 = vmatpush2.bf16.msra.mxu0 0
        %273 = vmatprep.subr.bf16.mxu0 0
        %274 = vmatpush2.bf16.msra.mxu0 0
        %275 = vmatprep.subr.bf16.mxu0 0
        %276 = vmatpush2.bf16.msra.mxu0 0
        %277 = vmatprep.subr.bf16.mxu0 0
        %278 = vmatpush2.bf16.msra.mxu0 0
        %279 = vmatprep.subr.bf16.mxu0 0
        %280 = vmatpush2.bf16.msra.mxu0 0
        %281 = vmatprep.mubr.bf16.mxu0 0
        %282 = vmatmul.mubr.bf16.gmra.mxu0 %v247
        %v283 = vpop.f32.mrf.mxu0
        %v284 = vadd.f32 %v238, %v283
        %v285 = vpop.f32.mrf.mxu0
        %v286 = vpop.f32.mrf.mxu0
        %v287 = vpop.f32.mrf.mxu0
        %288 = vdwg.mxu0
        %v289 = vmax.f32 %v284, 0.0
        %v290 = vpack.c.bf16 %v289, %v289
        %v291 = vld [vmem:[%s2] sm:$0xf]
        %v292 = vld [vmem:[%s2 + $0x4] sm:$0xf]
        %v293 = vld [vmem:[%s2 + $0x8] sm:$0xf]
        %v294 = vld [vmem:[%s2 + $0xc] sm:$0xf]
        %v295 = vld [vmem:[%s2 + $0x10] sm:$0xf]
        %v296 = vld [vmem:[%s2 + $0x14] sm:$0xf]
        %v297 = vld [vmem:[%s2 + $0x18] sm:$0xf]
        %v298 = vld [vmem:[%s2 + $0x1c] sm:$0xf]
        %v299 = vld [vmem:[%s2 + $0x20] sm:$0xf]
        %v300 = vld [vmem:[%s2 + $0x24] sm:$0xf]
        %v301 = vld [vmem:[%s2 + $0x28] sm:$0xf]
        %v302 = vld [vmem:[%s2 + $0x2c] sm:$0xf]
        %v303 = vld [vmem:[%s2 + $0x30] sm:$0xf]
        %v304 = vld [vmem:[%s2 + $0x34] sm:$0xf]
        %v305 = vld [vmem:[%s2 + $0x38] sm:$0xf]
        %v306 = vld [vmem:[%s2 + $0x3c] sm:$0xf]
        %v307 = vld [vmem:[%s2 + $0x40] sm:$0x1]
        %v308 = vunpack.c.l.bf16 %v307
        %v309 = vlaneseq
        %v310 = vshrl.u32 %v309, 7
        %v311 = vsub.s32 0, %v310
        %v312 = vrot.slane %v308, %v311
        %v329 = vunpack.c.l.b16 %v291
        %v330 = vunpack.c.l.b16 %v292
        %v331 = vunpack.c.l.b16 %v293
        %v332 = vunpack.c.l.b16 %v294
        %v333 = vunpack.c.l.b16 %v295
        %v334 = vunpack.c.l.b16 %v296
        %v335 = vunpack.c.l.b16 %v297
        %v336 = vunpack.c.l.b16 %v298
        %v337 = vunpack.c.l.b16 %v299
        %v338 = vunpack.c.l.b16 %v300
        %v339 = vunpack.c.l.b16 %v301
        %v340 = vunpack.c.l.b16 %v302
        %v341 = vunpack.c.l.b16 %v303
        %v342 = vunpack.c.l.b16 %v304
        %v343 = vunpack.c.l.b16 %v305
        %v344 = vunpack.c.l.b16 %v306
        %v345 = vpack.c.b16 %v330, %v329
        %v346 = vpack.c.b16 %v332, %v331
        %v347 = vpack.c.b16 %v334, %v333
        %v348 = vpack.c.b16 %v336, %v335
        %v349 = vpack.c.b16 %v338, %v337
        %v350 = vpack.c.b16 %v340, %v339
        %v351 = vpack.c.b16 %v342, %v341
        %v352 = vpack.c.b16 %v344, %v343
        %361 = vmatprep.subr.bf16.mxu0 0
        %362 = vmatpush1.bf16.msra.mxu0 %v352
        %363 = vmatprep.subr.bf16.mxu0 0
        %364 = vmatpush1.bf16.msra.mxu0 %v351
        %365 = vmatprep.subr.bf16.mxu0 0
        %366 = vmatpush1.bf16.msra.mxu0 %v350
        %367 = vmatprep.subr.bf16.mxu0 0
        %368 = vmatpush1.bf16.msra.mxu0 %v349
        %369 = vmatprep.subr.bf16.mxu0 0
        %370 = vmatpush1.bf16.msra.mxu0 %v348
        %371 = vmatprep.subr.bf16.mxu0 0
        %372 = vmatpush1.bf16.msra.mxu0 %v347
        %373 = vmatprep.subr.bf16.mxu0 0
        %374 = vmatpush1.bf16.msra.mxu0 %v346
        %375 = vmatprep.subr.bf16.mxu0 0
        %376 = vmatpush1.bf16.msra.mxu0 %v345
        %377 = vmatprep.subr.bf16.mxu0 0
        %378 = vmatpush2.bf16.msra.mxu0 0
        %379 = vmatprep.subr.bf16.mxu0 0
        %380 = vmatpush2.bf16.msra.mxu0 0
        %381 = vmatprep.subr.bf16.mxu0 0
        %382 = vmatpush2.bf16.msra.mxu0 0
        %383 = vmatprep.subr.bf16.mxu0 0
        %384 = vmatpush2.bf16.msra.mxu0 0
        %385 = vmatprep.subr.bf16.mxu0 0
        %386 = vmatpush2.bf16.msra.mxu0 0
        %387 = vmatprep.subr.bf16.mxu0 0
        %388 = vmatpush2.bf16.msra.mxu0 0
        %389 = vmatprep.subr.bf16.mxu0 0
        %390 = vmatpush2.bf16.msra.mxu0 0
        %391 = vmatprep.subr.bf16.mxu0 0
        %392 = vmatpush2.bf16.msra.mxu0 0
        %393 = vmatprep.mubr.bf16.mxu0 0
        %394 = vmatmul.mubr.bf16.gmra.mxu0 %v290
        %v395 = vpop.f32.mrf.mxu0
        %v396 = vadd.f32 %v312, %v395
        %v397 = vpop.f32.mrf.mxu0
        %v398 = vpop.f32.mrf.mxu0
        %v399 = vpop.f32.mrf.mxu0
        %400 = vdwg.mxu0
        %v401 = vmax.f32 %v396, 0.0
        %v402 = vpack.c.bf16 %v401, %v401
        %v403 = vld [vmem:[%s3] sm:$0xf]
        %v404 = vld [vmem:[%s3 + $0x4] sm:$0xf]
        %v405 = vld [vmem:[%s3 + $0x8] sm:$0xf]
        %v406 = vld [vmem:[%s3 + $0xc] sm:$0xf]
        %v407 = vld [vmem:[%s3 + $0x10] sm:$0xf]
        %v408 = vld [vmem:[%s3 + $0x14] sm:$0xf]
        %v409 = vld [vmem:[%s3 + $0x18] sm:$0xf]
        %v410 = vld [vmem:[%s3 + $0x1c] sm:$0xf]
        %v411 = vld [vmem:[%s3 + $0x20] sm:$0xf]
        %v412 = vld [vmem:[%s3 + $0x24] sm:$0xf]
        %v413 = vld [vmem:[%s3 + $0x28] sm:$0xf]
        %v414 = vld [vmem:[%s3 + $0x2c] sm:$0xf]
        %v415 = vld [vmem:[%s3 + $0x30] sm:$0xf]
        %v416 = vld [vmem:[%s3 + $0x34] sm:$0xf]
        %v417 = vld [vmem:[%s3 + $0x38] sm:$0xf]
        %v418 = vld [vmem:[%s3 + $0x3c] sm:$0xf]
        %v419 = vld [vmem:[%s3 + $0x40] sm:$0x1]
        %v420 = vunpack.c.l.bf16 %v419
        %v421 = vlaneseq
        %v422 = vshrl.u32 %v421, 7
        %v423 = vsub.s32 0, %v422
        %v424 = vrot.slane %v420, %v423
        %v441 = vunpack.c.l.b16 %v403
        %v442 = vunpack.c.l.b16 %v404
        %v443 = vunpack.c.l.b16 %v405
        %v444 = vunpack.c.l.b16 %v406
        %v445 = vunpack.c.l.b16 %v407
        %v446 = vunpack.c.l.b16 %v408
        %v447 = vunpack.c.l.b16 %v409
        %v448 = vunpack.c.l.b16 %v410
        %v449 = vunpack.c.l.b16 %v411
        %v450 = vunpack.c.l.b16 %v412
        %v451 = vunpack.c.l.b16 %v413
        %v452 = vunpack.c.l.b16 %v414
        %v453 = vunpack.c.l.b16 %v415
        %v454 = vunpack.c.l.b16 %v416
        %v455 = vunpack.c.l.b16 %v417
        %v456 = vunpack.c.l.b16 %v418
        %v457 = vpack.c.b16 %v442, %v441
        %v458 = vpack.c.b16 %v444, %v443
        %v459 = vpack.c.b16 %v446, %v445
        %v460 = vpack.c.b16 %v448, %v447
        %v461 = vpack.c.b16 %v450, %v449
        %v462 = vpack.c.b16 %v452, %v451
        %v463 = vpack.c.b16 %v454, %v453
        %v464 = vpack.c.b16 %v456, %v455
        %473 = vmatprep.subr.bf16.mxu0 0
        %474 = vmatpush1.bf16.msra.mxu0 %v464
        %475 = vmatprep.subr.bf16.mxu0 0
        %476 = vmatpush1.bf16.msra.mxu0 %v463
        %477 = vmatprep.subr.bf16.mxu0 0
        %478 = vmatpush1.bf16.msra.mxu0 %v462
        %479 = vmatprep.subr.bf16.mxu0 0
        %480 = vmatpush1.bf16.msra.mxu0 %v461
        %481 = vmatprep.subr.bf16.mxu0 0
        %482 = vmatpush1.bf16.msra.mxu0 %v460
        %483 = vmatprep.subr.bf16.mxu0 0
        %484 = vmatpush1.bf16.msra.mxu0 %v459
        %485 = vmatprep.subr.bf16.mxu0 0
        %486 = vmatpush1.bf16.msra.mxu0 %v458
        %487 = vmatprep.subr.bf16.mxu0 0
        %488 = vmatpush1.bf16.msra.mxu0 %v457
        %489 = vmatprep.subr.bf16.mxu0 0
        %490 = vmatpush2.bf16.msra.mxu0 0
        %491 = vmatprep.subr.bf16.mxu0 0
        %492 = vmatpush2.bf16.msra.mxu0 0
        %493 = vmatprep.subr.bf16.mxu0 0
        %494 = vmatpush2.bf16.msra.mxu0 0
        %495 = vmatprep.subr.bf16.mxu0 0
        %496 = vmatpush2.bf16.msra.mxu0 0
        %497 = vmatprep.subr.bf16.mxu0 0
        %498 = vmatpush2.bf16.msra.mxu0 0
        %499 = vmatprep.subr.bf16.mxu0 0
        %500 = vmatpush2.bf16.msra.mxu0 0
        %501 = vmatprep.subr.bf16.mxu0 0
        %502 = vmatpush2.bf16.msra.mxu0 0
        %503 = vmatprep.subr.bf16.mxu0 0
        %504 = vmatpush2.bf16.msra.mxu0 0
        %505 = vmatprep.mubr.bf16.mxu0 0
        %506 = vmatmul.mubr.bf16.gmra.mxu0 %v402
        %v507 = vpop.f32.mrf.mxu0
        %v508 = vadd.f32 %v424, %v507
        %v509 = vpop.f32.mrf.mxu0
        %v510 = vpop.f32.mrf.mxu0
        %v511 = vpop.f32.mrf.mxu0
        %512 = vdwg.mxu0
        %v513 = vlaneseq
        %v514 = vand.u32 %v513, 127
        %vm515 = vcmp.lt.s32.totalorder %v514, 3
        %v516 = vsel %vm515, %v508, -inf
        %vm517 = vcmask 64512
        %v518 = vsel %vm517, %v516, -inf
        %519 = vmax.xlane.f32.xlu0 %v518
        %v520 = vpop.xlane.xlu0 %519
        %v521 = vsub.f32 %v516, %v520
        %v522 = vmul.f32 %v521, 1.442695
        %v523 = vpow.pop %v522
        %v524 = vsel %vm517, %v523, 0.0
        %525 = vadd.xlane.f32.xlu0 %v524
        %v526 = vpop.xlane.xlu0 %525
        %v527 = vrcp.pop %v526
        %v528 = vmul.f32 %v523, %v527
        %vm529 = vcmp.ge.s32.totalorder %v514, 3
        %vm530 = vcmp.lt.s32.totalorder %v514, 6
        %vm531 = vmand %vm529, %vm530
        %v532 = vsel %vm531, %v508, -inf
        %v533 = vsel %vm517, %v532, -inf
        %534 = vmax.xlane.f32.xlu0 %v533
        %v535 = vpop.xlane.xlu0 %534
        %v536 = vsub.f32 %v532, %v535
        %v537 = vmul.f32 %v536, 1.442695
        %v538 = vpow.pop %v537
        %v539 = vsel %vm517, %v538, 0.0
        %540 = vadd.xlane.f32.xlu0 %v539
        %v541 = vpop.xlane.xlu0 %540
        %v542 = vrcp.pop %v541
        %v543 = vmul.f32 %v538, %v542
        %vm544 = vcmp.eq.s32.totalorder %v514, 6
        %v545 = vsel %vm544, %v508, 0.0
        %v546 = vadd.f32 %v528, %v543
        %v547 = vadd.f32 %v546, %v545
        %548 = vst.msk [vmem:[%s227] sm:$0xff] %vm517, %v547
        %p549 = scmp.lt.s32.totalorder %s19, 1
        %s550 = scalar_select %p549, %s19, 1
        %s551 = smul.addr %s550, 8
        %s552 = scalar_lea.vmem %s4, %s551
        // Predicated region
        $region45: #{tpu_custom_call.1} parent=35 // pred_check
          %p553 = pneg %p126
        $region46: #{tpu_custom_call.1} parent=35 // pred_check_branch
          %555 = sbr.rel (%p553) target = $region48
        $region47: #{tpu_custom_call.1} parent=35 // pred_region
          _
        $region48: #{tpu_custom_call.1} parent=35 // pred_fallthru
          _
      $region36: #{tpu_custom_call.1} parent=5 // pred_fallthru
        _
      %p556 = scmp.le.s32.totalorder 2, %s14
      // Predicated region
      $region49: #{tpu_custom_call.1} parent=5 // pred_check
        %p557 = pneg %p556
      $region50: #{tpu_custom_call.1} parent=5 // pred_check_branch
        %559 = sbr.rel (%p557) target = $region52
      $region51: #{tpu_custom_call.1} parent=5 // pred_region
        %s560 = ssub.s32 %s14, 2
        // Predicated region
        $region53: #{tpu_custom_call.1} parent=51 // pred_check
          %p561 = pneg %p132
        $region54: #{tpu_custom_call.1} parent=51 // pred_check_branch
          %563 = sbr.rel (%p561) target = $region56
        $region55: #{tpu_custom_call.1} parent=51 // pred_region
          %p564 = scmp.lt.s32.totalorder %s20, 1
          %s565 = scalar_select %p564, %s20, 1
          %s566 = smul.addr %s565, 8
          %s567 = scalar_lea.vmem %s4, %s566
        $region56: #{tpu_custom_call.1} parent=51 // pred_fallthru
          _
      $region52: #{tpu_custom_call.1} parent=5 // pred_fallthru
        _
    $region6: #{tpu_custom_call.1} parent=1 // loop_footer
      %s18 = sadd.s32 1, %s14
    $region7: #{tpu_custom_call.1} parent=1 // loop_footer_branch
      %13 = sbr.rel target = $region3
    $region8: #{tpu_custom_call.1} parent=1 // loop_exit
      _
    %568 = vsyncpa [#allocation3], 1
    %s569 = scalar_lea.sflag [#allocation3], 1
    %570 = vsyncpa %s569, 1
    %571 = vsyncpa [#allocation5], 1

</llo_original>
